<compile_context>
chip_gen: v7x
topology: tpu7x:2x2x1
jax: 0.10.0
libtpu: 0.0.40
codegen_flags: <defaults>
</compile_context>

<pallas_src>
import functools

import jax
import jax.numpy as jnp
from jax.experimental import pallas as pl
from jax.experimental.pallas import tpu as pltpu


# ---------------------------------------------------------------------------
# pltpu.roll direction probe (runs once, cached).  We need rolled[k] == x[k+d];
# the probe tells us whether to pass `n - d` (jnp.roll convention) or `d` as
# the shift, for both the lane axis and the sublane axis.
# ---------------------------------------------------------------------------
def _roll_probe_kernel(x_ref, lane_ref, sub_ref):
    x = x_ref[...]
    lane_ref[...] = pltpu.roll(x, 1, 1)   # roll along lanes (last axis)
    sub_ref[...] = pltpu.roll(x, 1, 0)    # roll along sublanes


@functools.lru_cache(maxsize=None)
def _roll_is_forward():
    x = jnp.arange(8 * 128, dtype=jnp.float32).reshape(8, 128)
    lane, sub = pl.pallas_call(
        _roll_probe_kernel,
        out_shape=(jax.ShapeDtypeStruct((8, 128), jnp.float32),
                   jax.ShapeDtypeStruct((8, 128), jnp.float32)),
    )(x)
    lane_fwd = bool(lane[0, 1] == x[0, 0])   # value at index 0 moved to index 1?
    sub_fwd = bool(sub[1, 0] == x[0, 0])
    return lane_fwd, sub_fwd


# ---------------------------------------------------------------------------
# Main kernel: one grid step handles TBC whole slabs, flattened to (TR, HW).
# ---------------------------------------------------------------------------
def _grad3d_kernel(x_ref, ww_ref, wh_ref, wd_ref, out_ref, *,
                   penalty, shift_w, shift_h, shift_d):
    x = x_ref[...]                                   # (TR, HW), input dtype

    def pen(diff):
        diff = diff.astype(jnp.float32)              # accumulate in f32
        return diff * diff if penalty == "l2" else jnp.abs(diff)

    # torch dz: neighbours along W  -> lane shift by 1   (wrap masked by ww)
    s_w = jnp.sum(pen(pltpu.roll(x, shift_w, 1) - x) * ww_ref[...])
    # torch dx: neighbours along H  -> lane shift by W   (wrap masked by wh)
    s_h = jnp.sum(pen(pltpu.roll(x, shift_h, 1) - x) * wh_ref[...])
    # torch dy: neighbours along D  -> sublane shift by 1 (seams masked by wd)
    s_d = jnp.sum(pen(pltpu.roll(x, shift_d, 0) - x) * wd_ref[...])

    contrib = s_w + s_h + s_d                        # already /count and /3
    out_ref[...] = jnp.broadcast_to(contrib, out_ref.shape).astype(out_ref.dtype)


def _pick_tbc(n_slabs, d, hw, itemsize, budget_bytes=2 * 1024 * 1024):
    """Largest divisor of n_slabs whose block fits the VMEM budget, preferring
    sublane-aligned (rows % 8 == 0) blocks."""
    slab_bytes = d * hw * itemsize
    divisors = [t for t in range(1, n_slabs + 1) if n_slabs % t == 0]
    fitting = [t for t in divisors if t * slab_bytes <= budget_bytes] or [1]
    aligned = [t for t in fitting if (t * d) % 8 == 0 or t == n_slabs]
    return max(aligned) if aligned else max(fitting)


def grad3d(y_pred, penalty="l1"):
    """Pallas implementation of Grad3d.forward(y_pred). Returns a scalar."""
    B, C, D, H, W = y_pred.shape
    N = B * C
    HW = H * W
    R = N * D

    # Element counts of the three finite-difference tensors (torch.mean).
    n_dx = N * D * (H - 1) * W     # torch dx: diff along H
    n_dy = N * (D - 1) * H * W     # torch dy: diff along D
    n_dz = N * D * H * (W - 1)     # torch dz: diff along W
    if n_dx == 0 or n_dy == 0 or n_dz == 0:
        # torch.mean over an empty diff tensor is nan; match that behaviour.
        return jnp.full((), jnp.nan, dtype=jnp.float32)

    x2 = y_pred.reshape(R, HW)     # row r = (b*C + c)*D + d, col k = h*W + w

    TBC = _pick_tbc(N, D, HW, y_pred.dtype.itemsize)
    TR = TBC * D                   # rows per block (whole slabs only)
    grid = N // TBC

    # Boundary masks with the 1/(3*count) scaling folded in (f32 weights).
    scale_h = 1.0 / (3.0 * n_dx)
    scale_d = 1.0 / (3.0 * n_dy)
    scale_w = 1.0 / (3.0 * n_dz)
    lane = jnp.arange(HW, dtype=jnp.int32)[None, :]          # (1, HW)
    row = jnp.arange(R, dtype=jnp.int32)[:, None]            # (R, 1)
    w_w = jnp.where(lane % W != W - 1, scale_w, 0.0).astype(jnp.float32)
    w_h = jnp.where(lane < (H - 1) * W, scale_h, 0.0).astype(jnp.float32)
    w_d = jnp.where(row % D != D - 1, scale_d, 0.0).astype(jnp.float32)

    # Static shifts such that rolled[k] = x[k + delta] along each axis.
    lane_fwd, sub_fwd = _roll_is_forward()
    shift_w = (HW - 1) % HW if lane_fwd else 1 % HW
    shift_h = (HW - W) % HW if lane_fwd else W % HW
    shift_d = (TR - 1) % TR if sub_fwd else 1 % TR

    kernel = functools.partial(
        _grad3d_kernel, penalty=penalty,
        shift_w=shift_w, shift_h=shift_h, shift_d=shift_d)

    n_elem = N * D * H * W
    cost = pl.CostEstimate(
        flops=12 * n_elem,
        transcendentals=0,
        bytes_accessed=n_elem * y_pred.dtype.itemsize + grid * 128 * 4)

    # TODO(synk): if a single (D, H*W) slab ever exceeds the VMEM budget
    # (v7x: 64 MiB), the D axis should additionally be tiled with seam handling.
    partial = pl.pallas_call(
        kernel,
        out_shape=jax.ShapeDtypeStruct((grid, 1, 128), jnp.float32),
        grid_spec=pltpu.PrefetchScalarGridSpec(
            num_scalar_prefetch=0,
            grid=(grid,),
            in_specs=[
                pl.BlockSpec((TR, HW), lambda i: (i, 0)),   # volume slabs
                pl.BlockSpec((1, HW), lambda i: (0, 0)),    # W-diff weights
                pl.BlockSpec((1, HW), lambda i: (0, 0)),    # H-diff weights
                pl.BlockSpec((TR, 1), lambda i: (i, 0)),    # D-diff weights
            ],
            out_specs=pl.BlockSpec((1, 1, 128), lambda i: (i, 0, 0)),
        ),
        compiler_params=pltpu.CompilerParams(
            dimension_semantics=("parallel",),  # independent per-step partials
            vmem_limit_bytes=48 * 1024 * 1024,
        ),
        cost_estimate=cost,
    )(x2, w_w, w_h, w_d)

    # Tiny final reduction over per-step partial sums.
    return jnp.sum(partial[:, 0, 0])


def _grad3d_reference(y_pred, penalty="l1"):
    dy = jnp.abs(y_pred[:, :, 1:, :, :] - y_pred[:, :, :-1, :, :])
    dx = jnp.abs(y_pred[:, :, :, 1:, :] - y_pred[:, :, :, :-1, :])
    dz = jnp.abs(y_pred[:, :, :, :, 1:] - y_pred[:, :, :, :, :-1])
    if penalty == "l2":
        dy, dx, dz = dy * dy, dx * dx, dz * dz
    return (jnp.mean(dx) + jnp.mean(dy) + jnp.mean(dz)) / 3.0


if __name__ == "__main__":
    # Grad3d has no learnable parameters; only the input volume is needed.
    key = jax.random.PRNGKey(0)
    B, C, D, H, W = 2, 4, 8, 16, 16
    y_pred = jax.random.normal(key, (B, C, D, H, W), dtype=jnp.float32)

    for penalty in ("l1", "l2"):
        out = jax.block_until_ready(grad3d(y_pred, penalty=penalty))
        ref = _grad3d_reference(y_pred, penalty=penalty)
        assert abs(float(out) - float(ref)) < 1e-5, (penalty, float(out), float(ref))

    print("KERNEL_OK")
</pallas_src>

<mosaic_0001>
module attributes {stable_mosaic.version = 11 : i64} {
  func.func @_roll_probe_kernel(%arg0: memref<8x128xf32, #tpu.memory_space<vmem>>, %arg1: memref<8x128xf32, #tpu.memory_space<vmem>>, %arg2: memref<8x128xf32, #tpu.memory_space<vmem>>) attributes {dimension_semantics = [], scalar_prefetch = 0 : i64, scratch_operands = 0 : i64, tpu.core_type = #tpu.core_type<tc>} {
    %c0 = arith.constant 0 : index
    %c0_0 = arith.constant 0 : index
    %0 = vector.load %arg0[%c0, %c0_0] : memref<8x128xf32, #tpu.memory_space<vmem>>, vector<8x128xf32>
    %c1_i32 = arith.constant 1 : i32
    %1 = tpu.dynamic_rotate %0 by %c1_i32 dim 1 : vector<8x128xf32>, i32 -> vector<8x128xf32>
    %c0_1 = arith.constant 0 : index
    %c0_2 = arith.constant 0 : index
    %2 = vector.load %arg1[%c0_1, %c0_2] : memref<8x128xf32, #tpu.memory_space<vmem>>, vector<8x128xf32>
    tpu.vector_store %arg1[%c0_1, %c0_2], %1 {strides = array<i32>} : memref<8x128xf32, #tpu.memory_space<vmem>>, vector<8x128xf32>,
    %c1_i32_3 = arith.constant 1 : i32
    %3 = tpu.dynamic_rotate %0 by %c1_i32_3 dim 0 : vector<8x128xf32>, i32 -> vector<8x128xf32>
    %c0_4 = arith.constant 0 : index
    %c0_5 = arith.constant 0 : index
    %4 = vector.load %arg2[%c0_4, %c0_5] : memref<8x128xf32, #tpu.memory_space<vmem>>, vector<8x128xf32>
    tpu.vector_store %arg2[%c0_4, %c0_5], %3 {strides = array<i32>} : memref<8x128xf32, #tpu.memory_space<vmem>>, vector<8x128xf32>,
    return
  }
}

</mosaic_0001>

<llo_original>
// kernel: tpu_custom_call.1
$region0: #{tpu_custom_call.1}
  #allocation0 [shape = 'u32[]', space=smem, size = 0x4, offset = 0x4, fixed_abs, tag = 'smem constant byte address 0x4 - core index']
  #allocation1 [shape = 'u32[144,128]{1,0:T(1,128)}', space=vmem, size = 0x12000, scoped, tag = 'internal scratch']
  %s0 = inlined_call_operand.hbm [shape: f32[8,128], index: 0, kind: input, shape index: {}]
  %s1 = inlined_call_operand.hbm [shape: f32[8,128], index: 1, kind: output, shape index: {0}]
  %s2 = inlined_call_operand.hbm [shape: f32[8,128], index: 2, kind: output, shape index: {1}]
  %3 = xla_tuple %s1, %s2
  %s4 = sld [smem:[#allocation0]]
  $region26: #{tpu_custom_call.1} parent=0
    _
  %s6 = ssub.s32 1, %s4
  %s7 = scalar_select 0, %s6, %s4
  $region1: #{tpu_custom_call.1} parent=0
    #allocation2 [shape = 'u8[4096]{0}', space=vmem, size = 0x1000, scoped, tag = 'input window, operand 0, single buffered']
    #allocation3 [shape = 's32[1]{0}', space=sflag, size = 0x4, scoped, tag = 'scoped memory for tpu_custom_call.1']
    #allocation4 [shape = 's32[1]{0}', space=sflag, size = 0x4, scoped, tag = 'scoped memory for tpu_custom_call.1']
    #allocation5 [shape = 'u8[4096]{0}', space=vmem, size = 0x1000, scoped, tag = 'output window, operand 0, single buffered']
    #allocation6 [shape = 'u8[4096]{0}', space=vmem, size = 0x1000, scoped, tag = 'output window, operand 1, single buffered']
    #allocation7 [shape = 's32[1]{0}', space=sflag, size = 0x4, scoped, tag = 'scoped memory for tpu_custom_call.1']
    %8 = vsyncpa [#allocation3], 0
    %9 = vsyncpa [#allocation4], 0
    %10 = vsyncpa [#allocation7], 0
    // Predicated region
    $region2: #{tpu_custom_call.1} parent=1 // pred_check
      _
    $region3: #{tpu_custom_call.1} parent=1 // pred_check_branch
      %12 = sbr.rel (0) target = $region5
    $region4: #{tpu_custom_call.1} parent=1 // pred_region
      %s14 = ssub.s32 128, 128
      %15 = vsyncadd [#allocation3], %s14
      %s17 = sshll.u32 [#allocation2], 4
      %s18 = int_to_ptr.vmem [resolvable:$true] %s17
      %20 = dma.hbm_to_vmem [thread:$0]  %s0, 128, %s18, [#allocation3]
    $region5: #{tpu_custom_call.1} parent=1 // pred_fallthru
      _
    // Predicated region
    $region6: #{tpu_custom_call.1} parent=1 // pred_check
      _
    $region7: #{tpu_custom_call.1} parent=1 // pred_check_branch
      %22 = sbr.rel (0) target = $region9
    $region8: #{tpu_custom_call.1} parent=1 // pred_region
      %23 = dma.done [#allocation3], 128
    $region9: #{tpu_custom_call.1} parent=1 // pred_fallthru
      _
    %v24 = vld [vmem:[#allocation2] sm:$0xff]
    %25 = vrot.lane.b32.xlu0 %v24, 1
    %v26 = vpop.permute.xlu0 %25
    %27 = vst [vmem:[#allocation5] sm:$0xff] %v26
    %v28 = vrot.slane %v24, 7
    %29 = vst [vmem:[#allocation6] sm:$0xff] %v28
    // Predicated region
    $region10: #{tpu_custom_call.1} parent=1 // pred_check
      _
    $region11: #{tpu_custom_call.1} parent=1 // pred_check_branch
      %31 = sbr.rel (0) target = $region13
    $region12: #{tpu_custom_call.1} parent=1 // pred_region
      %s33 = ssub.s32 128, 128
      %34 = vsyncadd [#allocation4], %s33
      %s36 = sshll.u32 [#allocation5], 4
      %s37 = int_to_ptr.vmem [resolvable:$true] %s36
      %39 = dma.vmem_to_hbm [thread:$0]  %s37, 128, %s1, [#allocation4]
    $region13: #{tpu_custom_call.1} parent=1 // pred_fallthru
      _
    // Predicated region
    $region14: #{tpu_custom_call.1} parent=1 // pred_check
      _
    $region15: #{tpu_custom_call.1} parent=1 // pred_check_branch
      %41 = sbr.rel (0) target = $region17
    $region16: #{tpu_custom_call.1} parent=1 // pred_region
      %s43 = ssub.s32 128, 128
      %44 = vsyncadd [#allocation7], %s43
      %s46 = sshll.u32 [#allocation6], 4
      %s47 = int_to_ptr.vmem [resolvable:$true] %s46
      %49 = dma.vmem_to_hbm [thread:$0]  %s47, 128, %s2, [#allocation7]
    $region17: #{tpu_custom_call.1} parent=1 // pred_fallthru
      _
    // Predicated region
    $region18: #{tpu_custom_call.1} parent=1 // pred_check
      _
    $region19: #{tpu_custom_call.1} parent=1 // pred_check_branch
      %51 = sbr.rel (0) target = $region21
    $region20: #{tpu_custom_call.1} parent=1 // pred_region
      %52 = dma.done [#allocation4], 128
    $region21: #{tpu_custom_call.1} parent=1 // pred_fallthru
      _
    // Predicated region
    $region22: #{tpu_custom_call.1} parent=1 // pred_check
      _
    $region23: #{tpu_custom_call.1} parent=1 // pred_check_branch
      %54 = sbr.rel (0) target = $region25
    $region24: #{tpu_custom_call.1} parent=1 // pred_region
      %55 = dma.done [#allocation7], 128
    $region25: #{tpu_custom_call.1} parent=1 // pred_fallthru
      _
    %56 = vsyncpa [#allocation3], 1
    %57 = vsyncpa [#allocation4], 1
    %58 = vsyncpa [#allocation7], 1

</llo_original>
